<compile_context>
chip_gen: v5e
topology: v5e:2x2
jax: 0.10.0
libtpu: 0.0.40
codegen_flags: <defaults>
</compile_context>

<pallas_src>
import functools

import jax
import jax.numpy as jnp
from jax.experimental import pallas as pl
from jax.experimental.pallas import tpu as pltpu


# ----------------------------- Pallas kernels ------------------------------

def _class0_prob_kernel(x_ref, o_ref):
    """softmax(x, axis=-1)[:, 0:1] — only the class-0 probability is needed.

    Exact division (no approx reciprocal) so that ranking of near-tied
    probabilities matches an exact softmax.
    """
    x = x_ref[...].astype(jnp.float32)
    m = jnp.max(x, axis=-1, keepdims=True)
    e = jnp.exp(x - m)
    denom = jnp.sum(e, axis=-1, keepdims=True)
    o_ref[...] = (e[:, 0:1] / denom).astype(o_ref.dtype)


def pallas_class0_prob(logits, *, row_tile=256, max_block_bytes=4 << 20):
    """Row-tiled class-0 probability so huge (rows, C) logits never blow VMEM."""
    rows, num_c = logits.shape
    rt = min(rows, row_tile)
    while rt > 8 and rt * num_c * 4 > max_block_bytes:
        rt //= 2
    if rt != rows and (rt % 8 != 0 or rows % rt != 0):
        rt = rows  # TODO(synk): pad ragged row counts instead of one full block.
    return pl.pallas_call(
        _class0_prob_kernel,
        out_shape=jax.ShapeDtypeStruct((rows, 1), jnp.float32),
        grid=(rows // rt,),
        in_specs=[pl.BlockSpec((rt, num_c), lambda r: (r, 0))],
        out_specs=pl.BlockSpec((rt, 1), lambda r: (r, 0)),
    )(logits)


def _fused_linear_kernel(x_ref, w_ref, head_ref, b_ref, o_ref, acc_ref, *,
                         tk, b_pad):
    """acc += x_chunk @ source_tile^T.

    source_tile is the pre-patched head slice when this class tile overlaps
    rows [0, b_pad) (the only rows the cutmix scatter can touch), otherwise the
    original weight tile.  Patched bias is pre-built in the wrapper and simply
    added at the last reduction step.
    """
    j = pl.program_id(1)          # class-tile index (weight rows / out columns)
    kk = pl.program_id(2)         # latent-tile index (reduction axis, innermost)
    tn = w_ref.shape[0]
    full_d = x_ref.shape[1]

    @pl.when(kk == 0)
    def _():
        acc_ref[...] = jnp.zeros_like(acc_ref)

    # x is VMEM-resident across the whole (j, kk) sweep; slice the current chunk.
    if full_d == tk:              # single reduction tile -> static slice
        col0 = 0
    else:
        col0 = kk * tk
        if tk % 128 == 0:
            col0 = pl.multiple_of(col0, 128)
    x_chunk = x_ref[:, pl.ds(col0, tk)]

    # Contraction over the shared latent axis D: x (tm, tk) · src (tn, tk)^T.
    # Same NT dimension numbers as the production flash-attention q@k^T kernels;
    # keeps the (B, C) output lane-dense on the class axis and avoids a
    # wrapper-side HBM transpose of the (C, D) weight.
    nt_dims = (((1,), (1,)), ((), ()))

    def _accum(src_tile):
        acc_ref[...] += jax.lax.dot_general(
            x_chunk, src_tile, nt_dims, preferred_element_type=jnp.float32)

    is_patched = (j * tn) < b_pad
    if b_pad == tn:               # single head tile (B <= tn) -> static slice
        row_start = 0
    else:
        row_start = jnp.minimum(j * tn, b_pad - tn)   # clamped: always in-bounds
        if tn % 8 == 0:
            row_start = pl.multiple_of(row_start, 8)

    @pl.when(is_patched)
    def _():                      # rows [0, b_pad): use pre-patched head rows
        _accum(head_ref[pl.ds(row_start, tn), pl.ds(col0, tk)])

    @pl.when(jnp.logical_not(is_patched))
    def _():                      # untouched rows: stream the original weight
        _accum(w_ref[...])

    @pl.when(kk == pl.num_programs(2) - 1)
    def _():
        o_ref[...] = (acc_ref[...] + b_ref[...].astype(jnp.float32)).astype(o_ref.dtype)


# --------------------------- tiling / wrapper -------------------------------

def _fit_tile(dim, pref, align):
    """Largest tile <= pref that divides `dim` and is a multiple of `align`;
    full extent (always legal) when `dim` is small or no divisor exists."""
    if dim <= pref:
        return dim
    for t in range(pref - pref % align, align - 1, -align):
        if dim % t == 0:
            return t
    return dim  # TODO(synk): pad ragged dims instead of a full-extent block.


def pallas_reconstruct_linear(x, weight, bias_patched, idx, topk_idx, vals,
                              *, tm=256, tn=256, tk=1024,
                              compute_dtype=jnp.float32):
    """F.linear(x, mask, mask_b) where mask differs from `weight` only in rows [0, B).

    x: (B, D), weight: (C, D), bias_patched: (C,) already-patched bias,
    idx: (B,) destination rows (a permutation of [0, B)),
    topk_idx: (B, k) destination columns, vals: (B, k) replacement values.
    On v6e/v7x pass compute_dtype=jnp.bfloat16 to stream x/weight/head in bf16
    (f32 accumulation is kept).
    """
    bsz, dim = x.shape
    num_c, dim_w = weight.shape
    assert dim == dim_w
    if bsz > num_c:
        raise ValueError("batch must be <= number of classes (the PyTorch module "
                         "would index out of bounds).")

    out_dtype = x.dtype
    tm = _fit_tile(bsz, tm, 8)
    tn = _fit_tile(num_c, tn, 128)
    tk = _fit_tile(dim, tk, 128)
    # v7x megacore: the two TensorCores split the "parallel" axes; with a single
    # batch tile make sure the class axis has >= 2 tiles when divisibility allows.
    if num_c // tn < 2 and tn % 256 == 0:
        tn //= 2

    # Pre-patch only the rows the scatter can touch, rounded up to whole class
    # tiles so the kernel's head slice is always full-sized and in-bounds.
    # (tn | num_c and bsz <= num_c  =>  b_pad <= num_c.)
    b_pad = -(-bsz // tn) * tn
    head = weight[:b_pad]
    if topk_idx.shape[1] > 0:
        head = head.at[idx[:, None], topk_idx].set(vals.astype(head.dtype))

    # Optional narrow streaming (v6e/v7x): halves the dominant weight HBM stream.
    x_in = x.astype(compute_dtype)
    w_in = weight.astype(compute_dtype)
    head_in = head.astype(compute_dtype)
    bias_in = bias_patched.reshape(1, num_c).astype(jnp.float32)

    grid = (bsz // tm, num_c // tn, dim // tk)
    kernel = functools.partial(_fused_linear_kernel, tk=tk, b_pad=b_pad)

    # VMEM budget: double-buffered inputs + output, f32 accumulator, bias tile.
    in_item = jnp.dtype(compute_dtype).itemsize
    out_item = jnp.dtype(out_dtype).itemsize
    vmem_est = (2 * (tm * dim + b_pad * dim + tn * tk) * in_item
                + 2 * tm * tn * out_item + tm * tn * 4 + 2 * tn * 4)
    vmem_limit = int(max(vmem_est + (2 << 20), 32 << 20))

    # TODO(synk): if bsz > tm the weight stream is re-fetched per batch tile;
    # a (tn, D) cached strip (grid order j, i, kk) would amortize it.
    return pl.pallas_call(
        kernel,
        out_shape=jax.ShapeDtypeStruct((bsz, num_c), out_dtype),
        grid_spec=pltpu.PrefetchScalarGridSpec(
            num_scalar_prefetch=0,
            grid=grid,
            in_specs=[
                pl.BlockSpec((tm, dim), lambda i, j, kq: (i, 0)),      # x (resident)
                pl.BlockSpec((tn, tk), lambda i, j, kq: (j, kq)),      # original weight
                pl.BlockSpec((b_pad, dim), lambda i, j, kq: (0, 0)),   # patched head (resident)
                pl.BlockSpec((1, tn), lambda i, j, kq: (0, j)),        # patched bias row
            ],
            out_specs=pl.BlockSpec((tm, tn), lambda i, j, kq: (i, j)),
            scratch_shapes=[pltpu.VMEM((tm, tn), jnp.float32)],
        ),
        compiler_params=pltpu.CompilerParams(
            dimension_semantics=("parallel", "parallel", "arbitrary"),
            vmem_limit_bytes=vmem_limit,
        ),
    )(x_in, w_in, head_in, bias_in)


# ------------------------------- glue (JAX) --------------------------------
# TODO(synk): batch argsort (torch.sort descending) / torch.topk have no Pallas TPU
# primitive; they run in plain JAX on tiny (B,)/(B,k) tensors.  The (B_pad, D) head
# scatter and the (C,) bias scatter are also tiny plain-JAX glue.

def _discriminative_targets(weight, bias, p, output, output_f):
    """Scatter destinations + replacement values; the (C, D) mask is never built."""
    bsz = output.shape[0]
    num_c = weight.shape[0]
    if bsz > num_c:
        raise ValueError("batch must be <= number of classes (the PyTorch module "
                         "would index out of bounds).")

    # One row-tiled softmax-kernel call for both logit sets; only class-0 is used.
    p0 = pallas_class0_prob(jnp.concatenate([output, output_f], axis=0))[:, 0]
    # TODO(synk): tie-breaking of equal probabilities may differ from torch.sort.
    idx = jnp.argsort(-p0[:bsz]).astype(jnp.int32)       # (B,) destination rows
    idx_f = jnp.argsort(-p0[bsz:]).astype(jnp.int32)     # (B,) source rows

    k = int(round(num_c * p))                            # same rounding as the module
    if k > 0:
        _, topk_idx = jax.lax.top_k(weight[idx], k)      # (B, k) destination columns
        # mask[idx_f, topk_idx_f] == top-k VALUES of weight[idx_f] (gather-free)
        vals, _ = jax.lax.top_k(weight[idx_f], k)        # (B, k) replacement values
        topk_idx = topk_idx.astype(jnp.int32)
    else:                                                # k == 0: no weight patch
        topk_idx = jnp.zeros((bsz, 0), jnp.int32)
        vals = jnp.zeros((bsz, 0), weight.dtype)
    mask_b = bias.at[idx].set(bias[idx_f])               # patched bias, (C,)
    return idx, topk_idx, vals, mask_b


def reconstruct_dropout_forward(weight, bias, p, features, features_f,
                                output, output_f, *, compute_dtype=jnp.float32,
                                tm=256, tn=256, tk=1024):
    # features_f is accepted for API parity; like the PyTorch module, index
    # selection only looks at the logits.
    # NOTE: compute_dtype=bfloat16 streams x/weight/head in bf16 (f32 accumulate);
    # the demo tolerance below is only validated for the default f32 path.
    del features_f
    idx, topk_idx, vals, mask_b = _discriminative_targets(weight, bias, p,
                                                          output, output_f)
    return pallas_reconstruct_linear(features, weight, mask_b, idx, topk_idx, vals,
                                     tm=tm, tn=tn, tk=tk,
                                     compute_dtype=compute_dtype)


# --------------------------------- demo ------------------------------------

if __name__ == "__main__":
    B, C, D = 8, 16, 32          # batch, classes (weight rows), latent dim
    drop_rate = 0.25             # -> k = round(C * p) = 4

    key = jax.random.PRNGKey(0)
    kw, kb, kf, kff, ko, kof = jax.random.split(key, 6)
    weight = jax.random.normal(kw, (C, D), dtype=jnp.float32)
    bias = jax.random.normal(kb, (C,), dtype=jnp.float32)
    features = jax.random.normal(kf, (B, D), dtype=jnp.float32)
    features_f = jax.random.normal(kff, (B, D), dtype=jnp.float32)
    output = jax.random.normal(ko, (B, C), dtype=jnp.float32)
    output_f = jax.random.normal(kof, (B, C), dtype=jnp.float32)

    fwd = jax.jit(reconstruct_dropout_forward, static_argnums=(2,))
    out = fwd(weight, bias, drop_rate, features, features_f, output, output_f)
    out = jax.block_until_ready(out)
    assert out.shape == (B, C) and out.dtype == jnp.float32

    # (a) class-0 probability kernel vs exact softmax
    stacked = jnp.concatenate([output, output_f], axis=0)
    p0_ref = jax.nn.softmax(stacked, axis=1)[:, 0:1]
    p0_ker = pallas_class0_prob(stacked)
    assert float(jnp.max(jnp.abs(p0_ker - p0_ref))) < 1e-5

    # (b) fused linear kernel vs explicit full-mask construction (same indices)
    idx, topk_idx, vals, mask_b = _discriminative_targets(weight, bias, drop_rate,
                                                          output, output_f)
    mask = weight.at[idx[:, None], topk_idx].set(vals)
    ref = jnp.dot(features, mask.T,
                  precision=jax.lax.Precision.HIGHEST) + mask_b[None, :]
    assert float(jnp.max(jnp.abs(out - ref))) < 2e-3

    print("KERNEL_OK")
</pallas_src>

<mosaic_0001>
module attributes {stable_mosaic.version = 11 : i64} {
  func.func @_class0_prob_kernel(%arg0: i32, %arg1: memref<16x16xf32, #tpu.memory_space<vmem>>, %arg2: memref<16x1xf32, #tpu.memory_space<vmem>>) attributes {dimension_semantics = [#tpu.dimension_semantics<arbitrary>], iteration_bounds = array<i64: 1>, scalar_prefetch = 0 : i64, scratch_operands = 0 : i64, tpu.core_type = #tpu.core_type<tc>, window_params = [{transform_indices = @transform_0, window_bounds = array<i64: 16, 16>}, {transform_indices = @transform_1, window_bounds = array<i64: 16, 1>}]} {
    %c0 = arith.constant 0 : index
    %c0_0 = arith.constant 0 : index
    %0 = vector.load %arg1[%c0, %c0_0] : memref<16x16xf32, #tpu.memory_space<vmem>>, vector<16x16xf32>
    %cst = arith.constant dense<0xFF800000> : vector<16xf32>
    %1 = vector.multi_reduction <maximumf>, %0, %cst [1] : vector<16x16xf32> to vector<16xf32>
    %2 = vector.shape_cast %1 : vector<16xf32> to vector<16x1xf32>
    %3 = vector.broadcast %2 : vector<16x1xf32> to vector<16x16xf32>
    %4 = arith.subf %0, %3 : vector<16x16xf32>
    %5 = math.exp %4 : vector<16x16xf32>
    %cst_1 = arith.constant dense<0.000000e+00> : vector<16xf32>
    %6 = vector.multi_reduction <add>, %5, %cst_1 [1] : vector<16x16xf32> to vector<16xf32>
    %7 = vector.shape_cast %6 : vector<16xf32> to vector<16x1xf32>
    %8 = vector.extract_strided_slice %5 {offsets = [0, 0], sizes = [16, 1], strides = [1, 1]} : vector<16x16xf32> to vector<16x1xf32>
    %9 = arith.divf %8, %7 : vector<16x1xf32>
    %c0_2 = arith.constant 0 : index
    %c0_3 = arith.constant 0 : index
    %10 = vector.load %arg2[%c0_2, %c0_3] : memref<16x1xf32, #tpu.memory_space<vmem>>, vector<16x1xf32>
    tpu.vector_store %arg2[%c0_2, %c0_3], %9 {strides = array<i32>} : memref<16x1xf32, #tpu.memory_space<vmem>>, vector<16x1xf32>,
    return
  }
  func.func @transform_0(%arg0: i32) -> (i32, i32) {
    %c0_i32 = arith.constant 0 : i32
    %c0_i32_0 = arith.constant 0 : i32
    return %arg0, %c0_i32 : i32, i32
  }
  func.func @transform_1(%arg0: i32) -> (i32, i32) {
    %c0_i32 = arith.constant 0 : i32
    %c0_i32_0 = arith.constant 0 : i32
    return %arg0, %c0_i32 : i32, i32
  }
}

module attributes {stable_mosaic.version = 11 : i64} {
  func.func @_fused_linear_kernel(%arg0: i32, %arg1: i32, %arg2: i32, %arg3: memref<8x32xf32, #tpu.memory_space<vmem>>, %arg4: memref<16x32xf32, #tpu.memory_space<vmem>>, %arg5: memref<16x32xf32, #tpu.memory_space<vmem>>, %arg6: memref<1x16xf32, #tpu.memory_space<vmem>>, %arg7: memref<8x16xf32, #tpu.memory_space<vmem>>, %arg8: memref<8x16xf32, #tpu.memory_space<vmem>>) attributes {dimension_semantics = [#tpu.dimension_semantics<parallel>, #tpu.dimension_semantics<parallel>, #tpu.dimension_semantics<arbitrary>], iteration_bounds = array<i64: 1, 1, 1>, scalar_prefetch = 0 : i64, scratch_operands = 1 : i64, tpu.core_type = #tpu.core_type<tc>, window_params = [{transform_indices = @transform_0, window_bounds = array<i64: 8, 32>}, {transform_indices = @transform_1, window_bounds = array<i64: 16, 32>}, {pipeline_mode = #tpu.pipeline_mode<synchronous>, transform_indices = @transform_2, window_bounds = array<i64: 16, 32>}, {transform_indices = @transform_3, window_bounds = array<i64: 1, 16>}, {transform_indices = @transform_4, window_bounds = array<i64: 8, 16>}]} {
    %c0_i32 = arith.constant 0 : i32
    %0 = arith.cmpi eq, %arg2, %c0_i32 : i32
    %1 = arith.extui %0 : i1 to i32
    %c0_i32_0 = arith.constant 0 : i32
    %2 = arith.cmpi ne, %1, %c0_i32_0 : i32
    scf.if %2 {
      %cst = arith.constant 0.000000e+00 : f32
      %14 = vector.broadcast %cst : f32 to vector<8x16xf32>
      %c0_7 = arith.constant 0 : index
      %c0_8 = arith.constant 0 : index
      %15 = vector.load %arg8[%c0_7, %c0_8] : memref<8x16xf32, #tpu.memory_space<vmem>>, vector<8x16xf32>
      tpu.vector_store %arg8[%c0_7, %c0_8], %14 {strides = array<i32>} : memref<8x16xf32, #tpu.memory_space<vmem>>, vector<8x16xf32>,
    } else {
    }
    %c0 = arith.constant 0 : index
    %c0_1 = arith.constant 0 : index
    %3 = vector.load %arg3[%c0, %c0_1] : memref<8x32xf32, #tpu.memory_space<vmem>>, vector<8x32xf32>
    %c16_i32 = arith.constant 16 : i32
    %4 = arith.muli %arg1, %c16_i32 : i32
    %c16_i32_2 = arith.constant 16 : i32
    %5 = arith.cmpi slt, %4, %c16_i32_2 : i32
    %6 = arith.extui %5 : i1 to i32
    %c0_i32_3 = arith.constant 0 : i32
    %7 = arith.cmpi ne, %6, %c0_i32_3 : i32
    scf.if %7 {
      %c0_7 = arith.constant 0 : index
      %c0_8 = arith.constant 0 : index
      %14 = vector.load %arg5[%c0_7, %c0_8] : memref<16x32xf32, #tpu.memory_space<vmem>>, vector<16x32xf32>
      %c0_9 = arith.constant 0 : index
      %c0_10 = arith.constant 0 : index
      %15 = vector.load %arg8[%c0_9, %c0_10] : memref<8x16xf32, #tpu.memory_space<vmem>>, vector<8x16xf32>
      %cst = arith.constant dense<0.000000e+00> : vector<8x16xf32>
      %16 = tpu.matmul %3, %14, %cst {dimension_numbers = #tpu.dot_dimension_numbers<[1], [1], [0], [0], [0, 0, 1, 0], [], []>} : vector<8x32xf32>, vector<16x32xf32>, vector<8x16xf32> -> vector<8x16xf32>
      %17 = arith.addf %15, %16 : vector<8x16xf32>
      %c0_11 = arith.constant 0 : index
      %c0_12 = arith.constant 0 : index
      %18 = vector.load %arg8[%c0_11, %c0_12] : memref<8x16xf32, #tpu.memory_space<vmem>>, vector<8x16xf32>
      tpu.vector_store %arg8[%c0_11, %c0_12], %17 {strides = array<i32>} : memref<8x16xf32, #tpu.memory_space<vmem>>, vector<8x16xf32>,
    } else {
    }
    %true = arith.constant true
    %8 = arith.xori %5, %true : i1
    %9 = arith.extui %8 : i1 to i32
    %c0_i32_4 = arith.constant 0 : i32
    %10 = arith.cmpi ne, %9, %c0_i32_4 : i32
    scf.if %10 {
      %c0_7 = arith.constant 0 : index
      %c0_8 = arith.constant 0 : index
      %14 = vector.load %arg4[%c0_7, %c0_8] : memref<16x32xf32, #tpu.memory_space<vmem>>, vector<16x32xf32>
      %c0_9 = arith.constant 0 : index
      %c0_10 = arith.constant 0 : index
      %15 = vector.load %arg8[%c0_9, %c0_10] : memref<8x16xf32, #tpu.memory_space<vmem>>, vector<8x16xf32>
      %cst = arith.constant dense<0.000000e+00> : vector<8x16xf32>
      %16 = tpu.matmul %3, %14, %cst {dimension_numbers = #tpu.dot_dimension_numbers<[1], [1], [0], [0], [0, 0, 1, 0], [], []>} : vector<8x32xf32>, vector<16x32xf32>, vector<8x16xf32> -> vector<8x16xf32>
      %17 = arith.addf %15, %16 : vector<8x16xf32>
      %c0_11 = arith.constant 0 : index
      %c0_12 = arith.constant 0 : index
      %18 = vector.load %arg8[%c0_11, %c0_12] : memref<8x16xf32, #tpu.memory_space<vmem>>, vector<8x16xf32>
      tpu.vector_store %arg8[%c0_11, %c0_12], %17 {strides = array<i32>} : memref<8x16xf32, #tpu.memory_space<vmem>>, vector<8x16xf32>,
    } else {
    }
    %c0_i32_5 = arith.constant 0 : i32
    %11 = arith.cmpi eq, %arg2, %c0_i32_5 : i32
    %12 = arith.extui %11 : i1 to i32
    %c0_i32_6 = arith.constant 0 : i32
    %13 = arith.cmpi ne, %12, %c0_i32_6 : i32
    scf.if %13 {
      %c0_7 = arith.constant 0 : index
      %c0_8 = arith.constant 0 : index
      %14 = vector.load %arg8[%c0_7, %c0_8] : memref<8x16xf32, #tpu.memory_space<vmem>>, vector<8x16xf32>
      %c0_9 = arith.constant 0 : index
      %c0_10 = arith.constant 0 : index
      %15 = vector.load %arg6[%c0_9, %c0_10] : memref<1x16xf32, #tpu.memory_space<vmem>>, vector<1x16xf32>
      %16 = vector.broadcast %15 : vector<1x16xf32> to vector<8x16xf32>
      %17 = arith.addf %14, %16 : vector<8x16xf32>
      %c0_11 = arith.constant 0 : index
      %c0_12 = arith.constant 0 : index
      %18 = vector.load %arg7[%c0_11, %c0_12] : memref<8x16xf32, #tpu.memory_space<vmem>>, vector<8x16xf32>
      tpu.vector_store %arg7[%c0_11, %c0_12], %17 {strides = array<i32>} : memref<8x16xf32, #tpu.memory_space<vmem>>, vector<8x16xf32>,
    } else {
    }
    return
  }
  func.func @transform_0(%arg0: i32, %arg1: i32, %arg2: i32) -> (i32, i32) {
    %c0_i32 = arith.constant 0 : i32
    %c0_i32_0 = arith.constant 0 : i32
    return %arg0, %c0_i32 : i32, i32
  }
  func.func @transform_1(%arg0: i32, %arg1: i32, %arg2: i32) -> (i32, i32) {
    %c0_i32 = arith.constant 0 : i32
    return %arg1, %arg2 : i32, i32
  }
  func.func @transform_2(%arg0: i32, %arg1: i32, %arg2: i32) -> (i32, i32) {
    %c0_i32 = arith.constant 0 : i32
    %c0_i32_0 = arith.constant 0 : i32
    %c0_i32_1 = arith.constant 0 : i32
    return %c0_i32, %c0_i32_0 : i32, i32
  }
  func.func @transform_3(%arg0: i32, %arg1: i32, %arg2: i32) -> (i32, i32) {
    %c0_i32 = arith.constant 0 : i32
    %c0_i32_0 = arith.constant 0 : i32
    return %c0_i32, %arg1 : i32, i32
  }
  func.func @transform_4(%arg0: i32, %arg1: i32, %arg2: i32) -> (i32, i32) {
    %c0_i32 = arith.constant 0 : i32
    return %arg0, %arg1 : i32, i32
  }
}

</mosaic_0001>

<llo_original>
// kernel: reconstruct_dropout_forward.2
$region0: #{reconstruct_dropout_forward.2}
  #allocation0 [shape = 'u32[]', space=smem, size = 0x4, offset = 0x4, fixed_abs, tag = 'smem constant byte address 0x4 - core index']
  #allocation1 [shape = 'u32[72,128]{1,0:T(1,128)}', space=vmem, size = 0x9000, scoped, tag = 'internal scratch']
  %s0 = inlined_call_operand.vmem [shape: f32[16,16], index: 0, kind: input, shape index: {}]
  %s1 = inlined_call_operand.vmem [shape: f32[16,1], index: 1, kind: output, shape index: {}]
  %s2 = sld [smem:[#allocation0]]
  $region14: #{reconstruct_dropout_forward.2} parent=0
    _
  %s4 = ssub.s32 1, %s2
  %s5 = scalar_select 0, %s4, %s2
  // Predicated region
  $region2: #{reconstruct_dropout_forward.2} parent=0 // pred_check
    _
  $region3: #{reconstruct_dropout_forward.2} parent=0 // pred_check_branch
    %7 = sbr.rel (0) target = $region5
  $region4: #{reconstruct_dropout_forward.2} parent=0 // pred_region
    _
  $region5: #{reconstruct_dropout_forward.2} parent=0 // pred_fallthru
    _
  %v8 = vld [vmem:[%s0] sm:$0xff]
  %v9 = vld [vmem:[%s0 + $0x8] sm:$0xff]
  %vm10 = vcmask 130048
  %v11 = vsel %vm10, %v8, -inf
  %12 = vmax.xlane.f32.xlu0 %v11
  %v13 = vpop.xlane.xlu0 %12
  %v14 = vsel %vm10, %v9, -inf
  %15 = vmax.xlane.f32.xlu0 %v14
  %v16 = vpop.xlane.xlu0 %15
  %v17 = vsub.f32 %v8, %v13
  %v18 = vsub.f32 %v9, %v16
  %v19 = vmul.f32 %v17, 1.442695
  %v20 = vpow.pop %v19
  %v21 = vmul.f32 %v18, 1.442695
  %v22 = vpow.pop %v21
  %v23 = vsel %vm10, %v20, 0.0
  %24 = vadd.xlane.f32.xlu0 %v23
  %v25 = vpop.xlane.xlu0 %24
  %v26 = vsel %vm10, %v22, 0.0
  %27 = vadd.xlane.f32.xlu0 %v26
  %v28 = vpop.xlane.xlu0 %27
  %v29 = vrcp.pop %v25
  %v30 = vmul.f32 %v25, %v29
  %v31 = vsub.f32 1.0, %v30
  %v32 = vmul.f32 %v29, %v31
  %v33 = vadd.f32 %v29, %v32
  %vm34 = vweird.f32 %v25
  %vm35 = vweird.f32 %v29
  %vm36 = vmor %vm34, %vm35
  %v37 = vsel %vm36, %v29, %v33
  %v38 = vand.u32 2147483647, %v25
  %vm39 = vcmp.eq.f32.partialorder %v38, 8.507059e+37
  %v40 = vand.u32 %v25, 2147483648
  %v41 = vor.u32 1.1754944e-38, %v40
  %v42 = vsel %vm39, %v41, %v37
  %v43 = vmul.f32 %v20, %v42
  %v44 = vrcp.pop %v28
  %v45 = vmul.f32 %v28, %v44
  %v46 = vsub.f32 1.0, %v45
  %v47 = vmul.f32 %v44, %v46
  %v48 = vadd.f32 %v44, %v47
  %vm49 = vweird.f32 %v28
  %vm50 = vweird.f32 %v44
  %vm51 = vmor %vm49, %vm50
  %v52 = vsel %vm51, %v44, %v48
  %v53 = vand.u32 2147483647, %v28
  %vm54 = vcmp.eq.f32.partialorder %v53, 8.507059e+37
  %v55 = vand.u32 %v28, 2147483648
  %v56 = vor.u32 1.1754944e-38, %v55
  %v57 = vsel %vm54, %v56, %v52
  %v58 = vmul.f32 %v22, %v57
  %vm59 = vcmask 7168
  %60 = vst.msk [vmem:[%s1] sm:$0xff] %vm59, %v43
  %61 = vst.msk [vmem:[%s1 + $0x8] sm:$0xff] %vm59, %v58
  // Predicated region
  $region6: #{reconstruct_dropout_forward.2} parent=0 // pred_check
    _
  $region7: #{reconstruct_dropout_forward.2} parent=0 // pred_check_branch
    %63 = sbr.rel (0) target = $region9
  $region8: #{reconstruct_dropout_forward.2} parent=0 // pred_region
    _
  $region9: #{reconstruct_dropout_forward.2} parent=0 // pred_fallthru
    _
  // Predicated region
  $region10: #{reconstruct_dropout_forward.2} parent=0 // pred_check
    _
  $region11: #{reconstruct_dropout_forward.2} parent=0 // pred_check_branch
    %65 = sbr.rel (0) target = $region13
  $region12: #{reconstruct_dropout_forward.2} parent=0 // pred_region
    _
  $region13: #{reconstruct_dropout_forward.2} parent=0 // pred_fallthru
    _

// kernel: reconstruct_dropout_forward.3
$region0: #{reconstruct_dropout_forward.3}
  #allocation0 [shape = 'u32[]', space=smem, size = 0x4, offset = 0x4, fixed_abs, tag = 'smem constant byte address 0x4 - core index']
  #allocation1 [shape = 'u32[72,128]{1,0:T(1,128)}', space=vmem, size = 0x9000, scoped, tag = 'internal scratch']
  #allocation2 [shape = 'f32[8,16]{1,0:T(8,128)}', space=vmem, size = 0x1000, scoped, tag = 'scratch operand']
  %s0 = inlined_call_operand.vmem [shape: f32[8,32], index: 0, kind: input, shape index: {}]
  %s1 = inlined_call_operand.vmem [shape: f32[16,32], index: 1, kind: input, shape index: {}]
  %s2 = inlined_call_operand.vmem [shape: f32[16,32], index: 2, kind: input, shape index: {}]
  %s3 = inlined_call_operand.vmem [shape: f32[1,16], index: 3, kind: input, shape index: {}]
  %s4 = inlined_call_operand.hbm [shape: f32[8,16], index: 4, kind: output, shape index: {}]
  %s5 = sld [smem:[#allocation0]]
  $region42: #{reconstruct_dropout_forward.3} parent=0
    _
  %s7 = ssub.s32 1, %s5
  %s8 = scalar_select 0, %s7, %s5
  $region1: #{reconstruct_dropout_forward.3} parent=0
    #allocation3 [shape = 'u8[4096]{0}', space=vmem, size = 0x1000, scoped, tag = 'output window, operand 0, single buffered']
    #allocation4 [shape = 's32[1]{0}', space=sflag, size = 0x4, scoped, tag = 'scoped memory for reconstruct_dropout_forward.3']
    %9 = vsyncpa [#allocation4], 0
    // Predicated region
    $region2: #{reconstruct_dropout_forward.3} parent=1 // pred_check
      _
    $region3: #{reconstruct_dropout_forward.3} parent=1 // pred_check_branch
      %11 = sbr.rel (0) target = $region5
    $region4: #{reconstruct_dropout_forward.3} parent=1 // pred_region
      _
    $region5: #{reconstruct_dropout_forward.3} parent=1 // pred_fallthru
      _
    // Predicated region
    $region6: #{reconstruct_dropout_forward.3} parent=1 // pred_check
      _
    $region7: #{reconstruct_dropout_forward.3} parent=1 // pred_check_branch
      %13 = sbr.rel (0) target = $region9
    $region8: #{reconstruct_dropout_forward.3} parent=1 // pred_region
      _
    $region9: #{reconstruct_dropout_forward.3} parent=1 // pred_fallthru
      _
    // Predicated region
    $region10: #{reconstruct_dropout_forward.3} parent=1 // pred_check
      _
    $region11: #{reconstruct_dropout_forward.3} parent=1 // pred_check_branch
      %15 = sbr.rel (0) target = $region13
    $region12: #{reconstruct_dropout_forward.3} parent=1 // pred_region
      _
    $region13: #{reconstruct_dropout_forward.3} parent=1 // pred_fallthru
      _
    // Predicated region
    $region14: #{reconstruct_dropout_forward.3} parent=1 // pred_check
      _
    $region15: #{reconstruct_dropout_forward.3} parent=1 // pred_check_branch
      %17 = sbr.rel (0) target = $region17
    $region16: #{reconstruct_dropout_forward.3} parent=1 // pred_region
      _
    $region17: #{reconstruct_dropout_forward.3} parent=1 // pred_fallthru
      _
    %p18 = scmp.eq.s32.totalorder 0, 0
    // Predicated region
    $region18: #{reconstruct_dropout_forward.3} parent=1 // pred_check
      %p19 = pneg %p18
    $region19: #{reconstruct_dropout_forward.3} parent=1 // pred_check_branch
      %21 = sbr.rel (%p19) target = $region21
    $region20: #{reconstruct_dropout_forward.3} parent=1 // pred_region
      %vm22 = vcmask 130048
      %23 = vst.msk [vmem:[#allocation2] sm:$0xff] %vm22, 0.0
    $region21: #{reconstruct_dropout_forward.3} parent=1 // pred_fallthru
      _
    %v24 = vld [vmem:[%s0] sm:$0xff]
    %s25 = smul.u32 0, 16
    %p26 = scmp.lt.s32.totalorder %s25, 16
    // Predicated region
    $region22: #{reconstruct_dropout_forward.3} parent=1 // pred_check
      %p27 = pneg %p26
    $region23: #{reconstruct_dropout_forward.3} parent=1 // pred_check_branch
      %29 = sbr.rel (%p27) target = $region25
    $region24: #{reconstruct_dropout_forward.3} parent=1 // pred_region
      %v30 = vld [vmem:[%s2] sm:$0xff]
      %v31 = vld [vmem:[%s2 + $0x8] sm:$0xff]
      %v32 = vld [vmem:[#allocation2] sm:$0xff]
      %vm33 = vcmask 261120
      %v35 = vsel %vm33, %v24, 0
      %v38 = vsel %vm33, %v30, 0
      %v41 = vsel %vm33, %v31, 0
      %43 = vmatpush.xpose.msra.mxu0 0.0
      %44 = vmatpush.xpose.msra.mxu0 0.0
      %45 = vmatpush.xpose.msra.mxu0 0.0
      %46 = vmatpush.xpose.msra.mxu0 0.0
      %47 = vmatpush.xpose.msra.mxu0 0.0
      %48 = vmatpush.xpose.msra.mxu0 0.0
      %49 = vmatpush.xpose.msra.mxu0 0.0
      %50 = vmatpush.xpose.msra.mxu0 0.0
      %51 = vmatpush.xpose.msra.mxu0 0.0
      %52 = vmatpush.xpose.msra.mxu0 0.0
      %53 = vmatpush.xpose.msra.mxu0 0.0
      %54 = vmatpush.xpose.msra.mxu0 0.0
      %55 = vmatpush.xpose.msra.mxu0 0.0
      %56 = vmatpush.xpose.msra.mxu0 0.0
      %57 = vmatpush.xpose.msra.mxu0 %v41
      %58 = vmatpush.xpose.msra.mxu0 %v38
      %59 = vmatmul.f32.gmra.mxu0 %v35
      %v60 = vpop.f32.mrf.mxu0
      %v61 = vadd.f32 0.0, %v60
      %62 = vdwg.mxu0
      %v63 = vadd.f32 %v32, %v61
      %vm64 = vcmask 130048
      %65 = vst.msk [vmem:[#allocation2] sm:$0xff] %vm64, %v63
    $region25: #{reconstruct_dropout_forward.3} parent=1 // pred_fallthru
      _
    %p66 = scmp.ge.s32.totalorder %s25, 16
    // Predicated region
    $region26: #{reconstruct_dropout_forward.3} parent=1 // pred_check
      %p67 = pneg %p66
    $region27: #{reconstruct_dropout_forward.3} parent=1 // pred_check_branch
      %69 = sbr.rel (%p67) target = $region29
    $region28: #{reconstruct_dropout_forward.3} parent=1 // pred_region
      %v70 = vld [vmem:[%s1] sm:$0xff]
      %v71 = vld [vmem:[%s1 + $0x8] sm:$0xff]
      %v72 = vld [vmem:[#allocation2] sm:$0xff]
      %vm73 = vcmask 261120
      %v75 = vsel %vm73, %v24, 0
      %v78 = vsel %vm73, %v70, 0
      %v81 = vsel %vm73, %v71, 0
      %83 = vmatpush.xpose.msra.mxu0 0.0
      %84 = vmatpush.xpose.msra.mxu0 0.0
      %85 = vmatpush.xpose.msra.mxu0 0.0
      %86 = vmatpush.xpose.msra.mxu0 0.0
      %87 = vmatpush.xpose.msra.mxu0 0.0
      %88 = vmatpush.xpose.msra.mxu0 0.0
      %89 = vmatpush.xpose.msra.mxu0 0.0
      %90 = vmatpush.xpose.msra.mxu0 0.0
      %91 = vmatpush.xpose.msra.mxu0 0.0
      %92 = vmatpush.xpose.msra.mxu0 0.0
      %93 = vmatpush.xpose.msra.mxu0 0.0
      %94 = vmatpush.xpose.msra.mxu0 0.0
      %95 = vmatpush.xpose.msra.mxu0 0.0
      %96 = vmatpush.xpose.msra.mxu0 0.0
      %97 = vmatpush.xpose.msra.mxu0 %v81
      %98 = vmatpush.xpose.msra.mxu0 %v78
      %99 = vmatmul.f32.gmra.mxu0 %v75
      %v100 = vpop.f32.mrf.mxu0
      %v101 = vadd.f32 0.0, %v100
      %102 = vdwg.mxu0
      %v103 = vadd.f32 %v72, %v101
      %vm104 = vcmask 130048
      %105 = vst.msk [vmem:[#allocation2] sm:$0xff] %vm104, %v103
    $region29: #{reconstruct_dropout_forward.3} parent=1 // pred_fallthru
      _
    // Predicated region
    $region30: #{reconstruct_dropout_forward.3} parent=1 // pred_check
      %p106 = pneg %p18
    $region31: #{reconstruct_dropout_forward.3} parent=1 // pred_check_branch
      %108 = sbr.rel (%p106) target = $region33
    $region32: #{reconstruct_dropout_forward.3} parent=1 // pred_region
      %v109 = vld [vmem:[#allocation2] sm:$0xff]
      %v110 = vld [vmem:[%s3] sm:$0x1]
      %v112 = vperm.slane %v110, 0
      %v114 = vadd.f32 %v109, %v112
      %vm115 = vcmask 130048
      %116 = vst.msk [vmem:[#allocation3] sm:$0xff] %vm115, %v114
    $region33: #{reconstruct_dropout_forward.3} parent=1 // pred_fallthru
      _
    // Predicated region
    $region34: #{reconstruct_dropout_forward.3} parent=1 // pred_check
      _
    $region35: #{reconstruct_dropout_forward.3} parent=1 // pred_check_branch
      %118 = sbr.rel (0) target = $region37
    $region36: #{reconstruct_dropout_forward.3} parent=1 // pred_region
      %120 = vsyncadd [#allocation4], 0
      %s122 = sshll.u32 [#allocation3], 4
      %s123 = int_to_ptr.vmem [resolvable:$true] %s122
      %s124 = sshll.u32 %s4, 4
      %s125 = int_to_ptr.hbm [resolvable:$true] %s124
      %127 = dma.vmem_to_hbm [thread:$0]  %s123, 128, %s125, [#allocation4]
    $region37: #{reconstruct_dropout_forward.3} parent=1 // pred_fallthru
      _
    // Predicated region
    $region38: #{reconstruct_dropout_forward.3} parent=1 // pred_check
      _
    $region39: #{reconstruct_dropout_forward.3} parent=1 // pred_check_branch
      %129 = sbr.rel (0) target = $region41
    $region40: #{reconstruct_dropout_forward.3} parent=1 // pred_region
      %131 = dma.done [#allocation4], 128
    $region41: #{reconstruct_dropout_forward.3} parent=1 // pred_fallthru
      _
    %132 = vsyncpa [#allocation4], 1

</llo_original>
